<compile_context>
chip_gen: v5e
topology: v5e:2x2
jax: 0.10.0
libtpu: 0.0.40
codegen_flags: <defaults>
</compile_context>

<pallas_src>
import jax
import jax.numpy as jnp
from jax.experimental import pallas as pl
from jax.experimental.pallas import tpu as pltpu

_LANES = 128
# Safe everywhere: <= physical VMEM on v5e/v6e (128 MiB) and v7x (64 MiB),
# and above the 16 MiB v5e default scope.
_VMEM_LIMIT_BYTES = 32 * 1024 * 1024


def _round_up(x: int, m: int) -> int:
    return ((x + m - 1) // m) * m


def _make_sum_kernel(n_inputs: int, out_dtype):
    """Kernel body summing `n_inputs` same-shaped VMEM tiles into the output."""
    use_f32_acc = out_dtype != jnp.float32  # accumulate low-precision in f32

    def kernel(*refs):
        in_refs = refs[:n_inputs]
        out_ref = refs[n_inputs]
        if use_f32_acc:
            acc = in_refs[0][...].astype(jnp.float32)
            for r in in_refs[1:]:
                acc = acc + r[...].astype(jnp.float32)
            out_ref[...] = acc.astype(out_ref.dtype)
        else:
            acc = in_refs[0][...]
            for r in in_refs[1:]:
                acc = acc + r[...]
            out_ref[...] = acc

    return kernel


def add_pallas(xs):
    """Elementwise sum of a list/tuple of same-shaped arrays via Pallas."""
    xs = tuple(xs)
    n = len(xs)
    assert n >= 1
    shape = xs[0].shape
    dtype = xs[0].dtype
    for x in xs:
        assert x.shape == shape and x.dtype == dtype

    total = 1
    for d in shape:
        total *= d
    itemsize = dtype.itemsize

    # ---- lane-dense 2D layout -------------------------------------------
    # Collapse everything into a flat buffer viewed as (rows, L) with L a
    # multiple of 128 so every load/add/store is full vreg width & unmasked.
    lane_target = 8 * _LANES  # 1024 lanes per row (8 vregs wide)
    L = min(lane_target, _round_up(total, _LANES))
    rows = pl.cdiv(total, L)

    # ---- tile sizing against the double-buffered VMEM budget ------------
    # 2 pipeline buffers x (n inputs + 1 output) tiles must fit the scoped
    # VMEM limit, with ~25% headroom; cap per-tile size so we never overshoot
    # on v7x (64 MiB physical) even for small n.
    budget_per_tile = (_VMEM_LIMIT_BYTES * 3 // 4) // (2 * (n + 1))
    budget_per_tile = min(budget_per_tile, 4 * 1024 * 1024)
    tile_rows = max(8, (budget_per_tile // (L * itemsize)) // 8 * 8)

    if rows <= tile_rows:
        tm = rows                    # block equals full row extent (allowed)
        rows_padded = rows
    else:
        tm = tile_rows               # multiple of 8 -> satisfies (8,128) tiling
        rows_padded = _round_up(rows, tm)

    padded_total = rows_padded * L
    grid = (rows_padded // tm,)

    def to_2d(x):
        flat = x.reshape(-1)
        if padded_total != total:
            flat = jnp.pad(flat, (0, padded_total - total))
        return flat.reshape(rows_padded, L)

    xs2d = [to_2d(x) for x in xs]

    spec = pl.BlockSpec((tm, L), lambda i: (i, 0))

    out2d = pl.pallas_call(
        _make_sum_kernel(n, dtype),
        out_shape=jax.ShapeDtypeStruct((rows_padded, L), dtype),
        grid_spec=pltpu.PrefetchScalarGridSpec(
            num_scalar_prefetch=0,
            grid=grid,
            in_specs=[spec] * n,
            out_specs=spec,
        ),
        compiler_params=pltpu.CompilerParams(
            dimension_semantics=("parallel",),
            vmem_limit_bytes=_VMEM_LIMIT_BYTES,
        ),
    )(*xs2d)

    out_flat = out2d.reshape(-1)
    if padded_total != total:
        out_flat = out_flat[:total]
    return out_flat.reshape(shape)


if __name__ == "__main__":
    key = jax.random.PRNGKey(0)
    k1, k2, k3 = jax.random.split(key, 3)

    shape = (2, 4, 16, 16)  # NCHW
    x1 = jax.random.normal(k1, shape, dtype=jnp.float32)
    x2 = jax.random.normal(k2, shape, dtype=jnp.float32)
    x3 = jax.random.normal(k3, shape, dtype=jnp.float32)

    xs = [x1, x2, x3]

    out = add_pallas(xs)
    jax.block_until_ready(out)

    # Reference: torch.sum(torch.stack(x, dim=0), dim=0) == elementwise sum
    ref = jnp.sum(jnp.stack(xs, axis=0), axis=0)
    assert out.shape == ref.shape
    assert jnp.allclose(out, ref, atol=1e-5, rtol=1e-5)

    print("KERNEL_OK")
</pallas_src>

<mosaic_0001>
module attributes {stable_mosaic.version = 11 : i64} {
  func.func @kernel(%arg0: i32, %arg1: memref<2x1024xf32, #tpu.memory_space<vmem>>, %arg2: memref<2x1024xf32, #tpu.memory_space<vmem>>, %arg3: memref<2x1024xf32, #tpu.memory_space<vmem>>, %arg4: memref<2x1024xf32, #tpu.memory_space<vmem>>) attributes {dimension_semantics = [#tpu.dimension_semantics<parallel>], iteration_bounds = array<i64: 1>, scalar_prefetch = 0 : i64, scratch_operands = 0 : i64, tpu.core_type = #tpu.core_type<tc>, window_params = [{transform_indices = @transform_0, window_bounds = array<i64: 2, 1024>}, {transform_indices = @transform_1, window_bounds = array<i64: 2, 1024>}, {transform_indices = @transform_2, window_bounds = array<i64: 2, 1024>}, {transform_indices = @transform_3, window_bounds = array<i64: 2, 1024>}]} {
    %c0 = arith.constant 0 : index
    %c0_0 = arith.constant 0 : index
    %0 = vector.load %arg1[%c0, %c0_0] : memref<2x1024xf32, #tpu.memory_space<vmem>>, vector<2x1024xf32>
    %c0_1 = arith.constant 0 : index
    %c0_2 = arith.constant 0 : index
    %1 = vector.load %arg2[%c0_1, %c0_2] : memref<2x1024xf32, #tpu.memory_space<vmem>>, vector<2x1024xf32>
    %2 = arith.addf %0, %1 : vector<2x1024xf32>
    %c0_3 = arith.constant 0 : index
    %c0_4 = arith.constant 0 : index
    %3 = vector.load %arg3[%c0_3, %c0_4] : memref<2x1024xf32, #tpu.memory_space<vmem>>, vector<2x1024xf32>
    %4 = arith.addf %2, %3 : vector<2x1024xf32>
    %c0_5 = arith.constant 0 : index
    %c0_6 = arith.constant 0 : index
    %5 = vector.load %arg4[%c0_5, %c0_6] : memref<2x1024xf32, #tpu.memory_space<vmem>>, vector<2x1024xf32>
    tpu.vector_store %arg4[%c0_5, %c0_6], %4 {strides = array<i32>} : memref<2x1024xf32, #tpu.memory_space<vmem>>, vector<2x1024xf32>,
    return
  }
  func.func @transform_0(%arg0: i32) -> (i32, i32) {
    %c0_i32 = arith.constant 0 : i32
    %c0_i32_0 = arith.constant 0 : i32
    return %arg0, %c0_i32 : i32, i32
  }
  func.func @transform_1(%arg0: i32) -> (i32, i32) {
    %c0_i32 = arith.constant 0 : i32
    %c0_i32_0 = arith.constant 0 : i32
    return %arg0, %c0_i32 : i32, i32
  }
  func.func @transform_2(%arg0: i32) -> (i32, i32) {
    %c0_i32 = arith.constant 0 : i32
    %c0_i32_0 = arith.constant 0 : i32
    return %arg0, %c0_i32 : i32, i32
  }
  func.func @transform_3(%arg0: i32) -> (i32, i32) {
    %c0_i32 = arith.constant 0 : i32
    %c0_i32_0 = arith.constant 0 : i32
    return %arg0, %c0_i32 : i32, i32
  }
}

</mosaic_0001>

<llo_original>
// kernel: tpu_custom_call.1
$region0: #{tpu_custom_call.1}
  #allocation0 [shape = 'u32[]', space=smem, size = 0x4, offset = 0x4, fixed_abs, tag = 'smem constant byte address 0x4 - core index']
  #allocation1 [shape = 'u32[72,128]{1,0:T(1,128)}', space=vmem, size = 0x9000, scoped, tag = 'internal scratch']
  %s0 = inlined_call_operand.hbm [shape: f32[2,1024], index: 0, kind: input, shape index: {}]
  %s1 = inlined_call_operand.hbm [shape: f32[2,1024], index: 1, kind: input, shape index: {}]
  %s2 = inlined_call_operand.hbm [shape: f32[2,1024], index: 2, kind: input, shape index: {}]
  %s3 = inlined_call_operand.hbm [shape: f32[2,1024], index: 3, kind: output, shape index: {}]
  %s4 = sld [smem:[#allocation0]]
  $region34: #{tpu_custom_call.1} parent=0
    _
  %s6 = ssub.s32 1, %s4
  %s7 = scalar_select 0, %s6, %s4
  $region1: #{tpu_custom_call.1} parent=0
    #allocation2 [shape = 'u8[8192]{0}', space=vmem, size = 0x2000, scoped, tag = 'input window, operand 0, single buffered']
    #allocation3 [shape = 's32[1]{0}', space=sflag, size = 0x4, scoped, tag = 'scoped memory for tpu_custom_call.1']
    #allocation4 [shape = 's32[1]{0}', space=sflag, size = 0x4, scoped, tag = 'scoped memory for tpu_custom_call.1']
    #allocation5 [shape = 'u8[8192]{0}', space=vmem, size = 0x2000, scoped, tag = 'input window, operand 1, single buffered']
    #allocation6 [shape = 's32[1]{0}', space=sflag, size = 0x4, scoped, tag = 'scoped memory for tpu_custom_call.1']
    #allocation7 [shape = 'u8[8192]{0}', space=vmem, size = 0x2000, scoped, tag = 'input window, operand 2, single buffered']
    #allocation8 [shape = 'u8[8192]{0}', space=vmem, size = 0x2000, scoped, tag = 'output window, operand 0, single buffered']
    %8 = vsyncpa [#allocation3], 0
    %9 = vsyncpa [#allocation6], 0
    %10 = vsyncpa [#allocation4], 0
    // Predicated region
    $region2: #{tpu_custom_call.1} parent=1 // pred_check
      _
    $region3: #{tpu_custom_call.1} parent=1 // pred_check_branch
      %12 = sbr.rel (0) target = $region5
    $region4: #{tpu_custom_call.1} parent=1 // pred_region
      %14 = vsyncadd [#allocation3], 0
      %s16 = sshll.u32 %s0, 4
      %s17 = int_to_ptr.hbm [resolvable:$true] %s16
      %s18 = sshll.u32 [#allocation2], 4
      %s19 = int_to_ptr.vmem [resolvable:$true] %s18
      %21 = dma.hbm_to_vmem [thread:$0]  %s17, 256, %s19, [#allocation3]
    $region5: #{tpu_custom_call.1} parent=1 // pred_fallthru
      _
    // Predicated region
    $region6: #{tpu_custom_call.1} parent=1 // pred_check
      _
    $region7: #{tpu_custom_call.1} parent=1 // pred_check_branch
      %23 = sbr.rel (0) target = $region9
    $region8: #{tpu_custom_call.1} parent=1 // pred_region
      %25 = vsyncadd [#allocation6], 0
      %s27 = sshll.u32 %s1, 4
      %s28 = int_to_ptr.hbm [resolvable:$true] %s27
      %s29 = sshll.u32 [#allocation5], 4
      %s30 = int_to_ptr.vmem [resolvable:$true] %s29
      %32 = dma.hbm_to_vmem [thread:$0]  %s28, 256, %s30, [#allocation6]
    $region9: #{tpu_custom_call.1} parent=1 // pred_fallthru
      _
    // Predicated region
    $region10: #{tpu_custom_call.1} parent=1 // pred_check
      _
    $region11: #{tpu_custom_call.1} parent=1 // pred_check_branch
      %34 = sbr.rel (0) target = $region13
    $region12: #{tpu_custom_call.1} parent=1 // pred_region
      %36 = vsyncadd [#allocation6], 0
      %s38 = sshll.u32 %s2, 4
      %s39 = int_to_ptr.hbm [resolvable:$true] %s38
      %s40 = sshll.u32 [#allocation7], 4
      %s41 = int_to_ptr.vmem [resolvable:$true] %s40
      %43 = dma.hbm_to_vmem [thread:$0]  %s39, 256, %s41, [#allocation6]
    $region13: #{tpu_custom_call.1} parent=1 // pred_fallthru
      _
    // Predicated region
    $region14: #{tpu_custom_call.1} parent=1 // pred_check
      _
    $region15: #{tpu_custom_call.1} parent=1 // pred_check_branch
      %45 = sbr.rel (0) target = $region17
    $region16: #{tpu_custom_call.1} parent=1 // pred_region
      %47 = dma.done [#allocation3], 256
    $region17: #{tpu_custom_call.1} parent=1 // pred_fallthru
      _
    // Predicated region
    $region18: #{tpu_custom_call.1} parent=1 // pred_check
      _
    $region19: #{tpu_custom_call.1} parent=1 // pred_check_branch
      %49 = sbr.rel (0) target = $region21
    $region20: #{tpu_custom_call.1} parent=1 // pred_region
      %51 = dma.done [#allocation6], 256
    $region21: #{tpu_custom_call.1} parent=1 // pred_fallthru
      _
    // Predicated region
    $region22: #{tpu_custom_call.1} parent=1 // pred_check
      _
    $region23: #{tpu_custom_call.1} parent=1 // pred_check_branch
      %53 = sbr.rel (0) target = $region25
    $region24: #{tpu_custom_call.1} parent=1 // pred_region
      %55 = dma.done [#allocation6], 256
    $region25: #{tpu_custom_call.1} parent=1 // pred_fallthru
      _
    %v56 = vld [vmem:[#allocation2] sm:$0xff]
    %v57 = vld [vmem:[#allocation2 + $0x8] sm:$0xff]
    %v58 = vld [vmem:[#allocation5] sm:$0xff]
    %v59 = vld [vmem:[#allocation5 + $0x8] sm:$0xff]
    %v60 = vadd.f32 %v56, %v58
    %v61 = vadd.f32 %v57, %v59
    %v62 = vld [vmem:[#allocation7] sm:$0xff]
    %v63 = vld [vmem:[#allocation7 + $0x8] sm:$0xff]
    %v64 = vadd.f32 %v60, %v62
    %v65 = vadd.f32 %v61, %v63
    %66 = vst [vmem:[#allocation8] sm:$0xff] %v64
    %67 = vst [vmem:[#allocation8 + $0x8] sm:$0xff] %v65
    // Predicated region
    $region26: #{tpu_custom_call.1} parent=1 // pred_check
      _
    $region27: #{tpu_custom_call.1} parent=1 // pred_check_branch
      %69 = sbr.rel (0) target = $region29
    $region28: #{tpu_custom_call.1} parent=1 // pred_region
      %71 = vsyncadd [#allocation4], 0
      %s73 = sshll.u32 [#allocation8], 4
      %s74 = int_to_ptr.vmem [resolvable:$true] %s73
      %s75 = sshll.u32 %s3, 4
      %s76 = int_to_ptr.hbm [resolvable:$true] %s75
      %78 = dma.vmem_to_hbm [thread:$0]  %s74, 256, %s76, [#allocation4]
    $region29: #{tpu_custom_call.1} parent=1 // pred_fallthru
      _
    // Predicated region
    $region30: #{tpu_custom_call.1} parent=1 // pred_check
      _
    $region31: #{tpu_custom_call.1} parent=1 // pred_check_branch
      %80 = sbr.rel (0) target = $region33
    $region32: #{tpu_custom_call.1} parent=1 // pred_region
      %82 = dma.done [#allocation4], 256
    $region33: #{tpu_custom_call.1} parent=1 // pred_fallthru
      _
    %83 = vsyncpa [#allocation3], 1
    %84 = vsyncpa [#allocation6], 1
    %85 = vsyncpa [#allocation4], 1

</llo_original>
